<compile_context>
chip_gen: v6e
topology: v6e:2x2x1
jax: 0.10.0
libtpu: 0.0.40
codegen_flags: <defaults>
</compile_context>

<pallas_src>
import jax
import jax.numpy as jnp
from jax.experimental import pallas as pl
from jax.experimental.pallas import tpu as pltpu

_LANES = 1024            # lane-dense last dim (multiple of 128)
_MAX_BLOCK_ROWS = 512    # 512 x 1024 f32 = 2 MiB per tile (<= 8 MiB resident w/ dbl-buffer)


def _round_up(x, m):
    return (x + m - 1) // m * m


def _linear_kernel(w_ref, b_ref, x_ref, o_ref):
    # w_ref, b_ref: (1,) scalars in SMEM; x_ref/o_ref: (block_rows, lanes) VMEM tiles.
    # Single fused multiply-add on full lane-dense vregs (VPU path, not MXU).
    o_ref[...] = x_ref[...] * w_ref[0] + b_ref[0]


def _linear_forward_pallas(x_flat, w_scalar, b_scalar):
    """x_flat: (N,) f32, w_scalar/b_scalar: (1,) f32 -> (N,) f32 = x*w + b."""
    n = x_flat.shape[0]
    # Lane-dense layout; for tiny inputs shrink to the minimal (8, 128) tile.
    lanes = _LANES if n >= _LANES else 128
    rows = pl.cdiv(n, lanes)
    block_rows = min(_MAX_BLOCK_ROWS, _round_up(rows, 8))
    rows_padded = _round_up(rows, block_rows)
    n_padded = rows_padded * lanes

    # Pad the ragged tail so every block stays (8,128)-aligned and unmasked.
    if n_padded != n:
        x_flat = jnp.pad(x_flat, (0, n_padded - n))
    x2d = x_flat.reshape(rows_padded, lanes)

    grid = (rows_padded // block_rows,)
    out2d = pl.pallas_call(
        _linear_kernel,
        out_shape=jax.ShapeDtypeStruct((rows_padded, lanes), x_flat.dtype),
        grid=grid,
        in_specs=[
            pl.BlockSpec(memory_space=pltpu.SMEM),                # weight scalar
            pl.BlockSpec(memory_space=pltpu.SMEM),                # bias scalar
            pl.BlockSpec((block_rows, lanes), lambda i: (i, 0)),  # x tile
        ],
        out_specs=pl.BlockSpec((block_rows, lanes), lambda i: (i, 0)),
        compiler_params=pltpu.CompilerParams(
            # Row axis is embarrassingly parallel: shards across both TCs on v7x,
            # no-op on single-core v5e/v6e.
            dimension_semantics=("parallel",),
        ),
    )(w_scalar, b_scalar, x2d)

    return out2d.reshape(n_padded)[:n]


def linear_regression_forward(x, weight, bias, *, min_pallas_elems=64 * 1024):
    """x: (N, 1) f32, weight: (1, 1) f32, bias: (1,) f32 -> (N, 1) f32."""
    n = x.shape[0]
    w_scalar = weight.reshape((1,))
    b_scalar = bias.reshape((1,))
    x_flat = x.reshape((n,))
    if n < min_pallas_elems:
        # Tiny inputs: kernel-launch/DMA overhead dominates; let XLA fuse it.
        y_flat = x_flat * w_scalar[0] + b_scalar[0]
    else:
        y_flat = _linear_forward_pallas(x_flat, w_scalar, b_scalar)
    return y_flat.reshape((n, 1))


if __name__ == "__main__":
    key = jax.random.PRNGKey(0)
    kx, kw, kb = jax.random.split(key, 3)

    # Deterministic parameters (mimics nn.Linear(1, 1) parameter shapes).
    weight = jax.random.uniform(kw, (1, 1), jnp.float32, minval=-1.0, maxval=1.0)
    bias = jax.random.uniform(kb, (1,), jnp.float32, minval=-1.0, maxval=1.0)

    # Small batch consistent with the forward: (batch=8, in_features=1).
    n = 8
    x = jax.random.normal(kx, (n, 1), jnp.float32)

    # Force the Pallas path even at this tiny size so the kernel is exercised.
    out = linear_regression_forward(x, weight, bias, min_pallas_elems=0)
    out = jax.block_until_ready(out)

    ref = x @ weight.T + bias
    assert out.shape == (n, 1)
    assert jnp.allclose(out, ref, atol=1e-6), "small-case mismatch vs reference"

    # Also exercise the lane-dense, multi-tile path with a ragged tail.
    n2 = 4 * _MAX_BLOCK_ROWS * _LANES + 37
    x2 = jax.random.normal(kx, (n2, 1), jnp.float32)
    out2 = jax.block_until_ready(linear_regression_forward(x2, weight, bias))
    ref2 = x2 @ weight.T + bias
    assert out2.shape == (n2, 1)
    assert jnp.allclose(out2, ref2, atol=1e-6), "tiled-case mismatch vs reference"

    print("KERNEL_OK")
</pallas_src>

<mosaic_0001>
module attributes {stable_mosaic.version = 11 : i64} {
  func.func @_linear_kernel(%arg0: i32, %arg1: memref<1xf32, #tpu.memory_space<smem>>, %arg2: memref<1xf32, #tpu.memory_space<smem>>, %arg3: memref<8x128xf32, #tpu.memory_space<vmem>>, %arg4: memref<8x128xf32, #tpu.memory_space<vmem>>) attributes {dimension_semantics = [#tpu.dimension_semantics<parallel>], iteration_bounds = array<i64: 1>, scalar_prefetch = 0 : i64, scratch_operands = 0 : i64, tpu.core_type = #tpu.core_type<tc>, window_params = [{transform_indices = @transform_0, window_bounds = array<i64: 1>}, {transform_indices = @transform_1, window_bounds = array<i64: 1>}, {transform_indices = @transform_2, window_bounds = array<i64: 8, 128>}, {transform_indices = @transform_3, window_bounds = array<i64: 8, 128>}]} {
    %c0 = arith.constant 0 : index
    %c0_0 = arith.constant 0 : index
    %0 = vector.load %arg3[%c0, %c0_0] : memref<8x128xf32, #tpu.memory_space<vmem>>, vector<8x128xf32>
    %c0_1 = arith.constant 0 : index
    %1 = memref.load %arg1[%c0_1] : memref<1xf32, #tpu.memory_space<smem>>
    %2 = vector.broadcast %1 : f32 to vector<8x128xf32>
    %3 = arith.mulf %0, %2 : vector<8x128xf32>
    %c0_2 = arith.constant 0 : index
    %4 = memref.load %arg2[%c0_2] : memref<1xf32, #tpu.memory_space<smem>>
    %5 = vector.broadcast %4 : f32 to vector<8x128xf32>
    %6 = arith.addf %3, %5 : vector<8x128xf32>
    %c0_3 = arith.constant 0 : index
    %c0_4 = arith.constant 0 : index
    %7 = vector.load %arg4[%c0_3, %c0_4] : memref<8x128xf32, #tpu.memory_space<vmem>>, vector<8x128xf32>
    tpu.vector_store %arg4[%c0_3, %c0_4], %6 {strides = array<i32>} : memref<8x128xf32, #tpu.memory_space<vmem>>, vector<8x128xf32>,
    return
  }
  func.func @transform_0(%arg0: i32) -> i32 {
    %c0_i32 = arith.constant 0 : i32
    %c0_i32_0 = arith.constant 0 : i32
    return %c0_i32 : i32
  }
  func.func @transform_1(%arg0: i32) -> i32 {
    %c0_i32 = arith.constant 0 : i32
    %c0_i32_0 = arith.constant 0 : i32
    return %c0_i32 : i32
  }
  func.func @transform_2(%arg0: i32) -> (i32, i32) {
    %c0_i32 = arith.constant 0 : i32
    %c0_i32_0 = arith.constant 0 : i32
    return %arg0, %c0_i32 : i32, i32
  }
  func.func @transform_3(%arg0: i32) -> (i32, i32) {
    %c0_i32 = arith.constant 0 : i32
    %c0_i32_0 = arith.constant 0 : i32
    return %arg0, %c0_i32 : i32, i32
  }
}

</mosaic_0001>

<llo_original>
// kernel: tpu_custom_call.1
$region0: #{tpu_custom_call.1}
  #allocation0 [shape = 'u32[]', space=smem, size = 0x4, offset = 0x4, fixed_abs, tag = 'smem constant byte address 0x4 - core index']
  #allocation1 [shape = 'u32[144,128]{1,0:T(1,128)}', space=vmem, size = 0x12000, scoped, tag = 'internal scratch']
  #allocation2 [shape = 'f32[1]{0:T(128)S(6)}', space=smem, size = 0x200, scoped, tag = 'scoped memory for tpu_custom_call.1']
  #allocation3 [shape = 'f32[1]{0:T(128)S(6)}', space=smem, size = 0x200, scoped, tag = 'scoped memory for tpu_custom_call.1']
  %s0 = inlined_call_operand.<no memory space> [shape: f32[1], index: 0, kind: input, shape index: {}]
  %s1 = inlined_call_operand.<no memory space> [shape: f32[1], index: 1, kind: input, shape index: {}]
  %s2 = inlined_call_operand.hbm [shape: f32[8,128], index: 2, kind: input, shape index: {}]
  %s3 = inlined_call_operand.hbm [shape: f32[8,128], index: 3, kind: output, shape index: {}]
  %s4 = sld [smem:[#allocation0]]
  $region26: #{tpu_custom_call.1} parent=0
    _
  %s6 = ssub.s32 1, %s4
  %s7 = scalar_select 0, %s6, %s4
  %8 = sst [smem:[#allocation2]] %s0
  %9 = sst [smem:[#allocation3]] %s1
  $region1: #{tpu_custom_call.1} parent=0
    #allocation4 [shape = 'u8[4096]{0}', space=vmem, size = 0x1000, scoped, tag = 'input window, operand 2, single buffered']
    #allocation5 [shape = 's32[1]{0}', space=sflag, size = 0x4, scoped, tag = 'scoped memory for tpu_custom_call.1']
    #allocation6 [shape = 's32[1]{0}', space=sflag, size = 0x4, scoped, tag = 'scoped memory for tpu_custom_call.1']
    #allocation7 [shape = 'u8[4096]{0}', space=vmem, size = 0x1000, scoped, tag = 'output window, operand 0, single buffered']
    %10 = vsyncpa [#allocation5], 0
    %11 = vsyncpa [#allocation6], 0
    // Predicated region
    $region2: #{tpu_custom_call.1} parent=1 // pred_check
      _
    $region3: #{tpu_custom_call.1} parent=1 // pred_check_branch
      %13 = sbr.rel (0) target = $region5
    $region4: #{tpu_custom_call.1} parent=1 // pred_region
      _
    $region5: #{tpu_custom_call.1} parent=1 // pred_fallthru
      _
    // Predicated region
    $region6: #{tpu_custom_call.1} parent=1 // pred_check
      _
    $region7: #{tpu_custom_call.1} parent=1 // pred_check_branch
      %15 = sbr.rel (0) target = $region9
    $region8: #{tpu_custom_call.1} parent=1 // pred_region
      _
    $region9: #{tpu_custom_call.1} parent=1 // pred_fallthru
      _
    // Predicated region
    $region10: #{tpu_custom_call.1} parent=1 // pred_check
      _
    $region11: #{tpu_custom_call.1} parent=1 // pred_check_branch
      %17 = sbr.rel (0) target = $region13
    $region12: #{tpu_custom_call.1} parent=1 // pred_region
      %s19 = ssub.s32 128, 128
      %20 = vsyncadd [#allocation5], %s19
      %s22 = sshll.u32 [#allocation4], 4
      %s23 = int_to_ptr.vmem [resolvable:$true] %s22
      %25 = dma.hbm_to_vmem [thread:$0]  %s2, 128, %s23, [#allocation5]
    $region13: #{tpu_custom_call.1} parent=1 // pred_fallthru
      _
    // Predicated region
    $region14: #{tpu_custom_call.1} parent=1 // pred_check
      _
    $region15: #{tpu_custom_call.1} parent=1 // pred_check_branch
      %27 = sbr.rel (0) target = $region17
    $region16: #{tpu_custom_call.1} parent=1 // pred_region
      %28 = dma.done [#allocation5], 128
    $region17: #{tpu_custom_call.1} parent=1 // pred_fallthru
      _
    %v29 = vld [vmem:[#allocation4] sm:$0xff]
    %s30 = sld [smem:[#allocation2]]
    %v31 = vstv %s30
    %v32 = vmul.f32 %v29, %v31
    %s33 = sld [smem:[#allocation3]]
    %v34 = vstv %s33
    %v35 = vadd.f32 %v32, %v34
    %36 = vst [vmem:[#allocation7] sm:$0xff] %v35
    // Predicated region
    $region18: #{tpu_custom_call.1} parent=1 // pred_check
      _
    $region19: #{tpu_custom_call.1} parent=1 // pred_check_branch
      %38 = sbr.rel (0) target = $region21
    $region20: #{tpu_custom_call.1} parent=1 // pred_region
      %s40 = ssub.s32 128, 128
      %41 = vsyncadd [#allocation6], %s40
      %s43 = sshll.u32 [#allocation7], 4
      %s44 = int_to_ptr.vmem [resolvable:$true] %s43
      %46 = dma.vmem_to_hbm [thread:$0]  %s44, 128, %s3, [#allocation6]
    $region21: #{tpu_custom_call.1} parent=1 // pred_fallthru
      _
    // Predicated region
    $region22: #{tpu_custom_call.1} parent=1 // pred_check
      _
    $region23: #{tpu_custom_call.1} parent=1 // pred_check_branch
      %48 = sbr.rel (0) target = $region25
    $region24: #{tpu_custom_call.1} parent=1 // pred_region
      %49 = dma.done [#allocation6], 128
    $region25: #{tpu_custom_call.1} parent=1 // pred_fallthru
      _
    %50 = vsyncpa [#allocation5], 1
    %51 = vsyncpa [#allocation6], 1

</llo_original>
